<compile_context>
chip_gen: v7x
topology: tpu7x:2x2x1
jax: 0.10.0
libtpu: 0.0.40
codegen_flags: <defaults>
</compile_context>

<pallas_src>
import jax
import jax.numpy as jnp
from jax import lax
from jax.experimental import pallas as pl
from jax.experimental.pallas import tpu as pltpu


def _round_up(x, m):
    return ((x + m - 1) // m) * m


def _lane_pad(d):
    """Pad a lane-mapped dim.  Already 128-aligned -> untouched (no HBM pad copy).
    Otherwise pad to a 128 multiple, bumped to a 256 multiple (v6e/v7x MXU width)
    when that costs little extra."""
    if d % 128 == 0:
        return d
    p = _round_up(d, 128)
    if p % 256 != 0 and (p + 128) - d <= max(64, d // 4):
        p += 128
    return p


def _pick_div(padded, candidates):
    for c in candidates:
        if padded % c == 0:
            return c
    return padded


def _linear_fullk_kernel(h_ref, w_ref, b_ref, o_ref):
    """One (TM, TN) output tile; hidden dim fully VMEM-resident (no reduction axis)."""
    acc = lax.dot_general(
        h_ref[...], w_ref[...],
        dimension_numbers=(((1,), (1,)), ((), ())),   # h[:, k] . w[:, k]  == h @ W^T
        preferred_element_type=jnp.float32,
    )
    o_ref[...] = (acc + b_ref[...]).astype(o_ref.dtype)


def _linear_ktiled_kernel(h_ref, w_ref, b_ref, o_ref, acc_ref):
    """Fallback for very large hidden dims: K-tiled reduction with f32 accumulator."""
    k = pl.program_id(2)

    @pl.when(k == 0)
    def _init():
        acc_ref[...] = jnp.zeros_like(acc_ref)

    acc_ref[...] += lax.dot_general(
        h_ref[...], w_ref[...],
        dimension_numbers=(((1,), (1,)), ((), ())),
        preferred_element_type=jnp.float32,
    )

    @pl.when(k == pl.num_programs(2) - 1)
    def _finalize():
        o_ref[...] = (acc_ref[...] + b_ref[...]).astype(o_ref.dtype)


def attribute_decoder(h, weight, bias, *, operand_dtype=None):
    """y = h @ weight^T + bias, matching torch.nn.Linear(hidden, out).

    h:      [N, H]
    weight: [O, H]  (PyTorch nn.Linear layout; NOT transposed on the host)
    bias:   [O]
    operand_dtype: optionally cast h / weight (e.g. jnp.bfloat16) for ~2-3x MXU
        throughput on every TPU generation; accumulation stays f32. Opt-in
        because it rounds the inputs away from exact f32 nn.Linear numerics.
    returns [N, O] in h's original dtype.
    """
    N, H = h.shape
    O, H2 = weight.shape
    assert H == H2, "weight must be [out_channels, hidden_channels]"
    out_dtype = h.dtype

    if operand_dtype is not None:
        h = h.astype(operand_dtype)
        weight = weight.astype(operand_dtype)

    op_bytes = jnp.dtype(h.dtype).itemsize
    out_bytes = jnp.dtype(out_dtype).itemsize

    # ---- tile / padding selection --------------------------------------------
    # Rows: pick TM first, then round N up to a multiple of it (zero rows are
    # nearly free; avoids a degenerate TM=8 grid for e.g. N=520).  256 keeps the
    # v7x megacore fed for N >= 512 while staying well inside VMEM everywhere.
    TM = min(256, _round_up(N, 8))
    N_pad = _round_up(N, TM)

    H_pad = _lane_pad(H)          # contraction dim (lanes of h and W)
    O_pad = _lane_pad(O)          # output features (lanes of y / bias)

    def _vmem_need(tn, tk, with_acc):
        need = 2 * (TM * tk * op_bytes          # h tile (double buffered)
                    + tn * tk * op_bytes        # weight tile
                    + TM * tn * out_bytes)      # output tile
        if with_acc:
            need += TM * tn * 4                 # f32 accumulator scratch
        return need

    VMEM_BUDGET = 24 * 1024 * 1024  # headroom under the 32 MiB scoped default (all gens)

    if _vmem_need(O_pad, H_pad, False) <= VMEM_BUDGET:
        # Whole weight resident in VMEM as a single block -> DMA'd exactly once.
        full_k, TN, TK = True, O_pad, H_pad
    else:
        TN = _pick_div(O_pad, (512, 256, 128))
        if _vmem_need(TN, H_pad, False) <= VMEM_BUDGET:
            full_k, TK = True, H_pad
        else:
            # Very large hidden dim: K-tiled reduction grid.
            full_k, TK = False, 512
            H_pad = _round_up(H, TK)

    # ---- pad operands only when actually needed -------------------------------
    def _pad2(x, rows, cols):
        pr, pc = rows - x.shape[0], cols - x.shape[1]
        if pr or pc:
            x = jnp.pad(x, ((0, pr), (0, pc)))
        return x

    h_p = _pad2(h, N_pad, H_pad)
    w_p = _pad2(weight, O_pad, H_pad)                     # stays [O, H]: no transpose
    b_p = bias.astype(jnp.float32).reshape(1, O)
    if O_pad != O:
        b_p = jnp.pad(b_p, ((0, 0), (0, O_pad - O)))

    grid_m = N_pad // TM
    grid_n = O_pad // TN

    cost = pl.CostEstimate(
        flops=2 * N_pad * H_pad * O_pad,
        bytes_accessed=(h_p.size * h_p.dtype.itemsize
                        + w_p.size * w_p.dtype.itemsize
                        + b_p.size * b_p.dtype.itemsize
                        + N_pad * O_pad * out_bytes),
        transcendentals=0,
    )

    if full_k:
        grid = (grid_m, grid_n)
        in_specs = [
            pl.BlockSpec((TM, H_pad), lambda i, j: (i, 0)),   # h row tile
            pl.BlockSpec((TN, H_pad), lambda i, j: (j, 0)),   # weight (resident if grid_n==1)
            pl.BlockSpec((1, TN), lambda i, j: (0, j)),       # bias
        ]
        out_spec = pl.BlockSpec((TM, TN), lambda i, j: (i, j))
        kernel = _linear_fullk_kernel
        scratch = []
        dims = ("parallel", "parallel")
    else:
        grid = (grid_m, grid_n, H_pad // TK)
        in_specs = [
            pl.BlockSpec((TM, TK), lambda i, j, k: (i, k)),
            pl.BlockSpec((TN, TK), lambda i, j, k: (j, k)),
            pl.BlockSpec((1, TN), lambda i, j, k: (0, j)),
        ]
        out_spec = pl.BlockSpec((TM, TN), lambda i, j, k: (i, j))
        kernel = _linear_ktiled_kernel
        scratch = [pltpu.VMEM((TM, TN), jnp.float32)]
        dims = ("parallel", "parallel", "arbitrary")

    out_padded = pl.pallas_call(
        kernel,
        out_shape=jax.ShapeDtypeStruct((N_pad, O_pad), out_dtype),
        grid_spec=pltpu.PrefetchScalarGridSpec(
            num_scalar_prefetch=0,
            grid=grid,
            in_specs=in_specs,
            out_specs=out_spec,
            scratch_shapes=scratch,
        ),
        compiler_params=pltpu.CompilerParams(dimension_semantics=dims),
        cost_estimate=cost,
    )(h_p, w_p, b_p)

    if N_pad != N or O_pad != O:
        out_padded = out_padded[:N, :O]
    return out_padded


if __name__ == "__main__":
    # Small shapes consistent with the module: N nodes, hidden_channels, out_channels.
    N, hidden_channels, out_channels = 8, 32, 16

    key = jax.random.PRNGKey(0)
    k_h, k_w, k_b = jax.random.split(key, 3)

    # PyTorch nn.Linear parameter layout: W [O, H], b [O].
    h = jax.random.normal(k_h, (N, hidden_channels), dtype=jnp.float32)
    w = jax.random.normal(k_w, (out_channels, hidden_channels), dtype=jnp.float32) * 0.1
    b = jax.random.normal(k_b, (out_channels,), dtype=jnp.float32) * 0.1

    out = attribute_decoder(h, w, b)
    out = jax.block_until_ready(out)

    # Reference (same math as torch.nn.Linear forward), full-precision matmul.
    ref = jnp.dot(h, w.T, precision=jax.lax.Precision.HIGHEST) + b
    assert out.shape == (N, out_channels)
    assert jnp.allclose(out, ref, atol=1e-5, rtol=1e-5)

    print("KERNEL_OK")
</pallas_src>

<mosaic_0001>
module attributes {stable_mosaic.version = 11 : i64} {
  func.func @_linear_fullk_kernel(%arg0: i32, %arg1: i32, %arg2: memref<8x128xf32, #tpu.memory_space<vmem>>, %arg3: memref<128x128xf32, #tpu.memory_space<vmem>>, %arg4: memref<1x128xf32, #tpu.memory_space<vmem>>, %arg5: memref<8x128xf32, #tpu.memory_space<vmem>>) attributes {dimension_semantics = [#tpu.dimension_semantics<parallel>, #tpu.dimension_semantics<parallel>], iteration_bounds = array<i64: 1, 1>, scalar_prefetch = 0 : i64, scratch_operands = 0 : i64, tpu.core_type = #tpu.core_type<tc>, window_params = [{transform_indices = @transform_0, window_bounds = array<i64: 8, 128>}, {transform_indices = @transform_1, window_bounds = array<i64: 128, 128>}, {transform_indices = @transform_2, window_bounds = array<i64: 1, 128>}, {transform_indices = @transform_3, window_bounds = array<i64: 8, 128>}]} {
    %c0 = arith.constant 0 : index
    %c0_0 = arith.constant 0 : index
    %0 = vector.load %arg2[%c0, %c0_0] : memref<8x128xf32, #tpu.memory_space<vmem>>, vector<8x128xf32>
    %c0_1 = arith.constant 0 : index
    %c0_2 = arith.constant 0 : index
    %1 = vector.load %arg3[%c0_1, %c0_2] : memref<128x128xf32, #tpu.memory_space<vmem>>, vector<128x128xf32>
    %cst = arith.constant dense<0.000000e+00> : vector<8x128xf32>
    %2 = tpu.matmul %0, %1, %cst {dimension_numbers = #tpu.dot_dimension_numbers<[1], [1], [0], [0], [0, 0, 1, 0], [], []>} : vector<8x128xf32>, vector<128x128xf32>, vector<8x128xf32> -> vector<8x128xf32>
    %c0_3 = arith.constant 0 : index
    %c0_4 = arith.constant 0 : index
    %3 = vector.load %arg4[%c0_3, %c0_4] : memref<1x128xf32, #tpu.memory_space<vmem>>, vector<1x128xf32>
    %4 = vector.broadcast %3 : vector<1x128xf32> to vector<8x128xf32>
    %5 = arith.addf %2, %4 : vector<8x128xf32>
    %c0_5 = arith.constant 0 : index
    %c0_6 = arith.constant 0 : index
    %6 = vector.load %arg5[%c0_5, %c0_6] : memref<8x128xf32, #tpu.memory_space<vmem>>, vector<8x128xf32>
    tpu.vector_store %arg5[%c0_5, %c0_6], %5 {strides = array<i32>} : memref<8x128xf32, #tpu.memory_space<vmem>>, vector<8x128xf32>,
    return
  }
  func.func @transform_0(%arg0: i32, %arg1: i32) -> (i32, i32) {
    %c0_i32 = arith.constant 0 : i32
    %c0_i32_0 = arith.constant 0 : i32
    return %arg0, %c0_i32 : i32, i32
  }
  func.func @transform_1(%arg0: i32, %arg1: i32) -> (i32, i32) {
    %c0_i32 = arith.constant 0 : i32
    %c0_i32_0 = arith.constant 0 : i32
    return %arg1, %c0_i32 : i32, i32
  }
  func.func @transform_2(%arg0: i32, %arg1: i32) -> (i32, i32) {
    %c0_i32 = arith.constant 0 : i32
    %c0_i32_0 = arith.constant 0 : i32
    return %c0_i32, %arg1 : i32, i32
  }
  func.func @transform_3(%arg0: i32, %arg1: i32) -> (i32, i32) {
    %c0_i32 = arith.constant 0 : i32
    return %arg0, %arg1 : i32, i32
  }
}

</mosaic_0001>

<llo_original>
// kernel: tpu_custom_call.1
$region0: #{tpu_custom_call.1}
  #allocation0 [shape = 'u32[]', space=smem, size = 0x4, offset = 0x4, fixed_abs, tag = 'smem constant byte address 0x4 - core index']
  #allocation1 [shape = 'u32[144,128]{1,0:T(1,128)}', space=vmem, size = 0x12000, scoped, tag = 'internal scratch']
  %s0 = inlined_call_operand.hbm [shape: f32[8,128], index: 0, kind: input, shape index: {}]
  %s1 = inlined_call_operand.hbm [shape: f32[128,128], index: 1, kind: input, shape index: {}]
  %s2 = inlined_call_operand.vmem [shape: f32[1,128], index: 2, kind: input, shape index: {}]
  %s3 = inlined_call_operand.hbm [shape: f32[8,128], index: 3, kind: output, shape index: {}]
  %s4 = sld [smem:[#allocation0]]
  $region30: #{tpu_custom_call.1} parent=0
    _
  %s6 = ssub.s32 1, %s4
  %s7 = scalar_select 0, %s6, %s4
  $region1: #{tpu_custom_call.1} parent=0
    #allocation2 [shape = 'u8[4096]{0}', space=vmem, size = 0x1000, scoped, tag = 'input window, operand 0, single buffered']
    #allocation3 [shape = 's32[1]{0}', space=sflag, size = 0x4, scoped, tag = 'scoped memory for tpu_custom_call.1']
    #allocation4 [shape = 's32[1]{0}', space=sflag, size = 0x4, scoped, tag = 'scoped memory for tpu_custom_call.1']
    #allocation5 [shape = 'u8[65536]{0}', space=vmem, size = 0x10000, scoped, tag = 'input window, operand 1, single buffered']
    #allocation6 [shape = 's32[1]{0}', space=sflag, size = 0x4, scoped, tag = 'scoped memory for tpu_custom_call.1']
    #allocation7 [shape = 'u8[4096]{0}', space=vmem, size = 0x1000, scoped, tag = 'output window, operand 0, single buffered']
    %8 = vsyncpa [#allocation3], 0
    %9 = vsyncpa [#allocation6], 0
    %10 = vsyncpa [#allocation4], 0
    // Predicated region
    $region2: #{tpu_custom_call.1} parent=1 // pred_check
      _
    $region3: #{tpu_custom_call.1} parent=1 // pred_check_branch
      %12 = sbr.rel (0) target = $region5
    $region4: #{tpu_custom_call.1} parent=1 // pred_region
      %s14 = ssub.s32 128, 128
      %15 = vsyncadd [#allocation3], %s14
      %s17 = sshll.u32 [#allocation2], 4
      %s18 = int_to_ptr.vmem [resolvable:$true] %s17
      %20 = dma.hbm_to_vmem [thread:$0]  %s0, 128, %s18, [#allocation3]
    $region5: #{tpu_custom_call.1} parent=1 // pred_fallthru
      _
    // Predicated region
    $region6: #{tpu_custom_call.1} parent=1 // pred_check
      _
    $region7: #{tpu_custom_call.1} parent=1 // pred_check_branch
      %22 = sbr.rel (0) target = $region9
    $region8: #{tpu_custom_call.1} parent=1 // pred_region
      %s24 = ssub.s32 2048, 2048
      %25 = vsyncadd [#allocation6], %s24
      %s26 = sshll.u32 [#allocation5], 4
      %s27 = int_to_ptr.vmem [resolvable:$true] %s26
      %32 = dma.hbm_to_vmem [thread:$0]  %s1, 2048, %s27, [#allocation6], 128, 128, 8
    $region9: #{tpu_custom_call.1} parent=1 // pred_fallthru
      _
    // Predicated region
    $region10: #{tpu_custom_call.1} parent=1 // pred_check
      _
    $region11: #{tpu_custom_call.1} parent=1 // pred_check_branch
      %34 = sbr.rel (0) target = $region13
    $region12: #{tpu_custom_call.1} parent=1 // pred_region
      _
    $region13: #{tpu_custom_call.1} parent=1 // pred_fallthru
      _
    // Predicated region
    $region14: #{tpu_custom_call.1} parent=1 // pred_check
      _
    $region15: #{tpu_custom_call.1} parent=1 // pred_check_branch
      %36 = sbr.rel (0) target = $region17
    $region16: #{tpu_custom_call.1} parent=1 // pred_region
      %37 = dma.done [#allocation3], 128
    $region17: #{tpu_custom_call.1} parent=1 // pred_fallthru
      _
    // Predicated region
    $region18: #{tpu_custom_call.1} parent=1 // pred_check
      _
    $region19: #{tpu_custom_call.1} parent=1 // pred_check_branch
      %39 = sbr.rel (0) target = $region21
    $region20: #{tpu_custom_call.1} parent=1 // pred_region
      %40 = dma.done [#allocation6], 2048
    $region21: #{tpu_custom_call.1} parent=1 // pred_fallthru
      _
    %v41 = vld [vmem:[#allocation2] sm:$0xff]
    %v42 = vld [vmem:[#allocation5] sm:$0xff]
    %v43 = vld [vmem:[#allocation5 + $0x8] sm:$0xff]
    %v44 = vld [vmem:[#allocation5 + $0x10] sm:$0xff]
    %v45 = vld [vmem:[#allocation5 + $0x18] sm:$0xff]
    %v46 = vld [vmem:[#allocation5 + $0x20] sm:$0xff]
    %v47 = vld [vmem:[#allocation5 + $0x28] sm:$0xff]
    %v48 = vld [vmem:[#allocation5 + $0x30] sm:$0xff]
    %v49 = vld [vmem:[#allocation5 + $0x38] sm:$0xff]
    %v50 = vld [vmem:[#allocation5 + $0x40] sm:$0xff]
    %v51 = vld [vmem:[#allocation5 + $0x48] sm:$0xff]
    %v52 = vld [vmem:[#allocation5 + $0x50] sm:$0xff]
    %v53 = vld [vmem:[#allocation5 + $0x58] sm:$0xff]
    %v54 = vld [vmem:[#allocation5 + $0x60] sm:$0xff]
    %v55 = vld [vmem:[#allocation5 + $0x68] sm:$0xff]
    %v56 = vld [vmem:[#allocation5 + $0x70] sm:$0xff]
    %v57 = vld [vmem:[#allocation5 + $0x78] sm:$0xff]
    %v58 = vld [vmem:[%s2] sm:$0x1]
    %v60 = vlaneseq
    %v61 = vshrl.u32 %v60, 7
    %v62 = vsub.s32 0, %v61
    %v63 = vrot.slane %v58, %v62
    %65 = vmatprep.subr.mxu0 0.0
    %66 = vmatpush1.xpose.msra.mxu0 %v42
    %67 = vmatprep.subr.mxu0 0.0
    %68 = vmatpush1.xpose.msra.mxu0 %v43
    %69 = vmatprep.subr.mxu0 0.0
    %70 = vmatpush1.xpose.msra.mxu0 %v44
    %71 = vmatprep.subr.mxu0 0.0
    %72 = vmatpush1.xpose.msra.mxu0 %v45
    %73 = vmatprep.subr.mxu0 0.0
    %74 = vmatpush1.xpose.msra.mxu0 %v46
    %75 = vmatprep.subr.mxu0 0.0
    %76 = vmatpush1.xpose.msra.mxu0 %v47
    %77 = vmatprep.subr.mxu0 0.0
    %78 = vmatpush1.xpose.msra.mxu0 %v48
    %79 = vmatprep.subr.mxu0 0.0
    %80 = vmatpush1.xpose.msra.mxu0 %v49
    %81 = vmatprep.subr.mxu0 0.0
    %82 = vmatpush1.xpose.msra.mxu0 %v50
    %83 = vmatprep.subr.mxu0 0.0
    %84 = vmatpush1.xpose.msra.mxu0 %v51
    %85 = vmatprep.subr.mxu0 0.0
    %86 = vmatpush1.xpose.msra.mxu0 %v52
    %87 = vmatprep.subr.mxu0 0.0
    %88 = vmatpush1.xpose.msra.mxu0 %v53
    %89 = vmatprep.subr.mxu0 0.0
    %90 = vmatpush1.xpose.msra.mxu0 %v54
    %91 = vmatprep.subr.mxu0 0.0
    %92 = vmatpush1.xpose.msra.mxu0 %v55
    %93 = vmatprep.subr.mxu0 0.0
    %94 = vmatpush1.xpose.msra.mxu0 %v56
    %95 = vmatprep.subr.mxu0 0.0
    %96 = vmatpush1.xpose.msra.mxu0 %v57
    %97 = vmatprep.subr.mxu0 0.0
    %98 = vmatpush1.xpose.msra.mxu0 0.0
    %99 = vmatprep.subr.mxu0 0.0
    %100 = vmatpush1.xpose.msra.mxu0 0.0
    %101 = vmatprep.subr.mxu0 0.0
    %102 = vmatpush1.xpose.msra.mxu0 0.0
    %103 = vmatprep.subr.mxu0 0.0
    %104 = vmatpush1.xpose.msra.mxu0 0.0
    %105 = vmatprep.subr.mxu0 0.0
    %106 = vmatpush1.xpose.msra.mxu0 0.0
    %107 = vmatprep.subr.mxu0 0.0
    %108 = vmatpush1.xpose.msra.mxu0 0.0
    %109 = vmatprep.subr.mxu0 0.0
    %110 = vmatpush1.xpose.msra.mxu0 0.0
    %111 = vmatprep.subr.mxu0 0.0
    %112 = vmatpush1.xpose.msra.mxu0 0.0
    %113 = vmatprep.subr.mxu0 0.0
    %114 = vmatpush1.xpose.msra.mxu0 0.0
    %115 = vmatprep.subr.mxu0 0.0
    %116 = vmatpush1.xpose.msra.mxu0 0.0
    %117 = vmatprep.subr.mxu0 0.0
    %118 = vmatpush1.xpose.msra.mxu0 0.0
    %119 = vmatprep.subr.mxu0 0.0
    %120 = vmatpush1.xpose.msra.mxu0 0.0
    %121 = vmatprep.subr.mxu0 0.0
    %122 = vmatpush1.xpose.msra.mxu0 0.0
    %123 = vmatprep.subr.mxu0 0.0
    %124 = vmatpush1.xpose.msra.mxu0 0.0
    %125 = vmatprep.subr.mxu0 0.0
    %126 = vmatpush1.xpose.msra.mxu0 0.0
    %127 = vmatprep.subr.mxu0 0.0
    %128 = vmatpush1.xpose.msra.mxu0 0.0
    %129 = vmatprep.mubr.f32.mxu0 0.0
    %130 = vmatmul.mubr.f32.gmra.mrb[0].mxu0 %v41
    %v131 = vpop.f32.mrb[0].mxu0
    %v132 = vadd.f32 %v63, %v131
    %v133 = vpop.f32.mrb[0].mxu0
    %134 = vdwg.mxu0
    %135 = vst [vmem:[#allocation7] sm:$0xff] %v132
    // Predicated region
    $region22: #{tpu_custom_call.1} parent=1 // pred_check
      _
    $region23: #{tpu_custom_call.1} parent=1 // pred_check_branch
      %137 = sbr.rel (0) target = $region25
    $region24: #{tpu_custom_call.1} parent=1 // pred_region
      %s139 = ssub.s32 128, 128
      %140 = vsyncadd [#allocation4], %s139
      %s142 = sshll.u32 [#allocation7], 4
      %s143 = int_to_ptr.vmem [resolvable:$true] %s142
      %145 = dma.vmem_to_hbm [thread:$0]  %s143, 128, %s3, [#allocation4]
    $region25: #{tpu_custom_call.1} parent=1 // pred_fallthru
      _
    // Predicated region
    $region26: #{tpu_custom_call.1} parent=1 // pred_check
      _
    $region27: #{tpu_custom_call.1} parent=1 // pred_check_branch
      %147 = sbr.rel (0) target = $region29
    $region28: #{tpu_custom_call.1} parent=1 // pred_region
      %148 = dma.done [#allocation4], 128
    $region29: #{tpu_custom_call.1} parent=1 // pred_fallthru
      _
    %149 = vsyncpa [#allocation3], 1
    %150 = vsyncpa [#allocation6], 1
    %151 = vsyncpa [#allocation4], 1

</llo_original>
